<compile_context>
chip_gen: v5e
topology: v5e:2x2
jax: 0.10.0
libtpu: 0.0.40
codegen_flags: <defaults>
</compile_context>

<pallas_src>
import numpy as np
import jax
import jax.numpy as jnp
from jax.experimental import pallas as pl
from jax.experimental.pallas import tpu as pltpu

LEAKY_SLOPE = 0.01               # torch.nn.LeakyReLU default negative_slope
USE_BF16_MATMUL = True           # bf16 MXU operands for x @ W1 (f32 accumulate)
NODE_ROW_TILE = 2048             # K1 row tile (decoupled from K3)
EDGE_TILE = 4096                 # K2 edges per block (sublane axis)
DEFAULT_VMEM = 32 * 1024 * 1024  # scoped-VMEM budget safe on v5e/v6e/v7x


def _leaky_relu(x):
    return jnp.where(x >= 0, x, LEAKY_SLOPE * x)


def _round_up(x, m):
    return ((x + m - 1) // m) * m


def _tile(dim, max_tile):
    """Full-dim block for small dims (always legal), aligned tile otherwise.

    Note: at tiny N this collapses to a single block, leaving the 2nd v7x
    TensorCore idle; at production sizes the parallel grid axes shard across
    both cores.
    """
    return dim if dim <= max_tile else max_tile


def _k3_config():
    """(row_tile, col_tile, vmem_limit) for the dense-gate kernels.

    v7x has 64 MiB physical VMEM -> keep a 512x1024 working set (~12 MiB
    double-buffered).  v5e/v6e (128 MiB physical) get 1024x1024 tiles with a
    raised scoped-VMEM limit (~24 MiB double-buffered).
    """
    try:
        big_vmem = pltpu.get_tpu_info().vmem_capacity_bytes >= (100 << 20)
    except Exception:  # conservative fallback: v7x-safe everywhere
        big_vmem = False
    if big_vmem:
        return 1024, 1024, 64 * 1024 * 1024
    return 512, 1024, DEFAULT_VMEM


def prepare_params(params):
    """One-time parameter prep (hoisted off the forward path): zero-pad the
    latent dim to a multiple of 128 lanes, cast the K1 matmul weights, stack
    the degree-decoder scalars for SMEM."""
    W1, b1 = params["W1"], params["b1"]
    W2, b2 = params["W2"], params["b2"]
    D, L = W1.shape
    Lp = _round_up(L, 128)
    mm_dtype = jnp.bfloat16 if USE_BF16_MATMUL else jnp.float32
    W1p = jnp.zeros((D, Lp), jnp.float32).at[:, :L].set(W1).astype(mm_dtype)
    b1p = jnp.zeros((1, Lp), jnp.float32).at[:, :L].set(b1.reshape(1, L))
    # W2 stays f32: Z = xe @ W2 is tiny (N x Lp x Lp) and keeping it exact
    # avoids amplifying cancellation in Z[u] - Z[v] for similar nodes.
    W2p = jnp.zeros((Lp, Lp), jnp.float32).at[:L, :L].set(W2)
    b2p = params["b2"].reshape(1, L).astype(jnp.float32)          # unpadded (edge path)
    w3b3 = jnp.stack([params["w3"].reshape(()),
                      params["b3"].reshape(())]).astype(jnp.float32)
    return {"W1p": W1p, "b1p": b1p, "W2p": W2p, "b2p": b2p, "w3b3": w3b3,
            "in_dim": D, "latent": L, "latent_pad": Lp, "mm_dtype": mm_dtype}


# --------- Kernel 1: xe = LeakyReLU(x@W1+b1) and Z = xe@W2, fused ------------
def _node_encoder_kernel(x_ref, w1_ref, b1_ref, w2_ref, xe_ref, z_ref):
    xe = _leaky_relu(
        jnp.dot(x_ref[...], w1_ref[...], preferred_element_type=jnp.float32)
        + b1_ref[...])
    xe_ref[...] = xe
    # Edge matmul hoisted per-node via linearity: (u - v) @ W2 == Z[u] - Z[v].
    z_ref[...] = jnp.dot(xe, w2_ref[...], preferred_element_type=jnp.float32)


def node_encoder(x, prep):
    N, D = x.shape
    Lp = prep["latent_pad"]
    tm = _tile(N, NODE_ROW_TILE)
    return pl.pallas_call(
        _node_encoder_kernel,
        out_shape=(jax.ShapeDtypeStruct((N, Lp), jnp.float32),
                   jax.ShapeDtypeStruct((N, Lp), jnp.float32)),
        grid=(pl.cdiv(N, tm),),
        in_specs=[
            pl.BlockSpec((tm, D), lambda i: (i, 0)),
            pl.BlockSpec((D, Lp), lambda i: (0, 0)),     # weights VMEM-resident
            pl.BlockSpec((1, Lp), lambda i: (0, 0)),
            pl.BlockSpec((Lp, Lp), lambda i: (0, 0)),
        ],
        out_specs=(pl.BlockSpec((tm, Lp), lambda i: (i, 0)),
                   pl.BlockSpec((tm, Lp), lambda i: (i, 0))),
        compiler_params=pltpu.CompilerParams(
            dimension_semantics=("parallel",), vmem_limit_bytes=DEFAULT_VMEM),
    )(x.astype(prep["mm_dtype"]), prep["W1p"], prep["b1p"], prep["W2p"])


# --------- Kernel 2: per-edge rank, streaming over (E, L) Z-diff blocks ------
# edge_rank = sigmoid( sigmoid( sum(LeakyReLU(diffZ + b2), -1) ) + noise )
def _edge_rank_kernel(b2_ref, dz_ref, noise_ref, o_ref):
    feat = _leaky_relu(dz_ref[...] + b2_ref[...])                 # (te, L)
    r = jax.nn.sigmoid(jnp.sum(feat, axis=-1, keepdims=True))     # (te, 1)
    o_ref[...] = jax.nn.sigmoid(r + noise_ref[...])


def edge_rank(diff_z, b2p, noise):
    E, L = diff_z.shape
    te = _tile(E, EDGE_TILE)
    out = pl.pallas_call(
        _edge_rank_kernel,
        out_shape=jax.ShapeDtypeStruct((E, 1), jnp.float32),
        grid=(pl.cdiv(E, te),),
        in_specs=[
            pl.BlockSpec((1, L), lambda i: (0, 0)),               # b2 resident
            pl.BlockSpec((te, L), lambda i: (i, 0)),
            pl.BlockSpec((te, 1), lambda i: (i, 0)),
        ],
        out_specs=pl.BlockSpec((te, 1), lambda i: (i, 0)),
        compiler_params=pltpu.CompilerParams(
            dimension_semantics=("parallel",), vmem_limit_bytes=DEFAULT_VMEM),
    )(b2p, diff_z, noise)
    return out[:, 0]


# --------- Kernel 3a: fused soft rank gate (k = None path) -------------------
# out[i, c] = dense[i, c] * (1.5 - 0.5*tanh(rank[i, c] - kk_i))
def _rank_gate_soft_kernel(w3b3_ref, dense_ref, ranks_ref, rowsum_ref, o_ref):
    d = dense_ref[...]
    r = ranks_ref[...].astype(jnp.float32)        # raw int32 stream, cast on-chip
    # degree decoder: kk = LeakyReLU(w3 * rowsum + b3) per row (scalars in SMEM)
    kk = _leaky_relu(rowsum_ref[...] * w3b3_ref[0] + w3b3_ref[1])   # (tm, 1)
    # (1 - 0.5*(1 + tanh(rank - kk))) + 1.0  ==  1.5 - 0.5*tanh(rank - kk)
    o_ref[...] = d * (1.5 - 0.5 * jnp.tanh(r - kk))


def rank_gate_soft(dense, ranks, rowsum, w3b3):
    N = dense.shape[0]
    row_t, col_t, vmem = _k3_config()
    tm, tn = _tile(N, row_t), _tile(N, col_t)
    return pl.pallas_call(
        _rank_gate_soft_kernel,
        out_shape=jax.ShapeDtypeStruct((N, N), jnp.float32),
        grid=(pl.cdiv(N, tm), pl.cdiv(N, tn)),
        in_specs=[
            pl.BlockSpec(memory_space=pltpu.MemorySpace.SMEM),    # [w3, b3]
            pl.BlockSpec((tm, tn), lambda i, j: (i, j)),
            pl.BlockSpec((tm, tn), lambda i, j: (i, j)),
            pl.BlockSpec((tm, 1), lambda i, j: (i, 0)),
        ],
        out_specs=pl.BlockSpec((tm, tn), lambda i, j: (i, j)),
        compiler_params=pltpu.CompilerParams(
            dimension_semantics=("parallel", "parallel"),
            vmem_limit_bytes=vmem),
    )(w3b3, dense, ranks, rowsum)


# --------- Kernel 3b: hard top-k mask via per-row threshold (k given) --------
def _topk_mask_kernel(dense_ref, thr_ref, o_ref):
    d = dense_ref[...]
    o_ref[...] = jnp.where(d >= thr_ref[...], d, jnp.zeros_like(d))


def topk_mask(dense, thr):
    N = dense.shape[0]
    row_t, col_t, vmem = _k3_config()
    tm, tn = _tile(N, row_t), _tile(N, col_t)
    return pl.pallas_call(
        _topk_mask_kernel,
        out_shape=jax.ShapeDtypeStruct((N, N), jnp.float32),
        grid=(pl.cdiv(N, tm), pl.cdiv(N, tn)),
        in_specs=[
            pl.BlockSpec((tm, tn), lambda i, j: (i, j)),
            pl.BlockSpec((tm, 1), lambda i, j: (i, 0)),
        ],
        out_specs=pl.BlockSpec((tm, tn), lambda i, j: (i, j)),
        compiler_params=pltpu.CompilerParams(
            dimension_semantics=("parallel", "parallel"),
            vmem_limit_bytes=vmem),
    )(dense, thr)


# ---------------------------- forward (glue + kernels) -----------------------
def dgg_forward(prep, x, adj_rows, adj_cols, N, noise_key, k=None):
    L = prep["latent"]
    # ---- K1: node encoder + Z = xe @ W2, fused ----
    xe_p, z_p = node_encoder(x, prep)              # (N, Lp) f32 each
    xe = xe_p[:, :L]
    z = z_p[:, :L]

    E = int(adj_rows.shape[0])
    if E == 0:
        return jnp.zeros((N, N), jnp.float32), xe

    # ---- edge pipeline (K2): no ExL transpose, no per-edge matmul ----
    # TODO(synk): fusing this row gather into K2 needs in-kernel dynamic gather
    # (jnp.take on a VMEM-resident Z); kept in XLA for robustness.
    diff_z = z[adj_rows] - z[adj_cols]             # (E, L) f32, natural row layout
    noise = jax.random.uniform(noise_key, (E, 1), jnp.float32) * 2.0 - 1.0
    er = edge_rank(diff_z, prep["b2p"], noise)     # (E,) f32

    # ---- dense adjacency (torch to_dense sums duplicate COO entries) ----
    dense = jnp.zeros((N, N), jnp.float32).at[adj_rows, adj_cols].add(er)

    if k is not None:
        # Hard top-k: keep entries >= per-row k-th largest value (no N^2 argsort).
        # Tie handling at exactly-equal values may differ from torch.sort.
        kk = min(int(k), N)
        thr = jax.lax.top_k(dense, kk)[0][:, kk - 1:kk]            # (N, 1)
        out_adj = topk_mask(dense, thr)
    else:
        # O(E) row degree (== dense.sum(-1)), then per-element within-row rank.
        rowsum = jnp.zeros((N,), jnp.float32).at[adj_rows].add(er)
        # TODO(synk): row-wise argsort/rank has no Pallas primitive; stays in XLA.
        order = jnp.argsort(-dense, axis=-1)
        row_idx = jnp.arange(N)[:, None]
        ranks = jnp.zeros((N, N), jnp.int32).at[row_idx, order].set(
            jnp.broadcast_to(jnp.arange(N, dtype=jnp.int32)[None, :], (N, N)))
        out_adj = rank_gate_soft(dense, ranks, rowsum.reshape(N, 1), prep["w3b3"])

    # PyTorch returns out_adj.to_sparse(); we return the equivalent dense matrix.
    return out_adj, xe


if __name__ == "__main__":
    key = jax.random.PRNGKey(0)
    k_param, k_adj, k_noise1, k_noise2, k_x = jax.random.split(key, 5)

    N, IN_DIM, LATENT = 8, 16, 32      # args.extra_edge_dim = 0

    kw1, kb1, kw2, kb2 = jax.random.split(k_param, 4)
    params = {
        "W1": jax.random.normal(kw1, (IN_DIM, LATENT), jnp.float32) * 0.1,
        "b1": jax.random.normal(kb1, (LATENT,), jnp.float32) * 0.1,
        "W2": jax.random.normal(kw2, (LATENT, LATENT), jnp.float32) * 0.1,
        "b2": jax.random.normal(kb2, (LATENT,), jnp.float32) * 0.1,
        "w3": jnp.array([[0.5]], jnp.float32),   # degree_decoder Linear(1,1) weight
        "b3": jnp.array([[0.1]], jnp.float32),   # degree_decoder Linear(1,1) bias
    }
    prep = prepare_params(params)

    x = jax.random.normal(k_x, (N, IN_DIM), jnp.float32)

    # deterministic sparse adjacency (COO indices), no self loops
    adj_mask = jnp.logical_and(jax.random.uniform(k_adj, (N, N)) < 0.4,
                               ~jnp.eye(N, dtype=bool))
    rows_np, cols_np = np.nonzero(np.asarray(adj_mask))
    adj_rows = jnp.asarray(rows_np, jnp.int32)
    adj_cols = jnp.asarray(cols_np, jnp.int32)

    # ---- end-to-end forward: soft (k=None) and hard (k=3) paths ----
    out_adj, xe = dgg_forward(prep, x, adj_rows, adj_cols, N, k_noise1, k=None)
    out_adj_k, _ = dgg_forward(prep, x, adj_rows, adj_cols, N, k_noise2, k=3)
    jax.block_until_ready((out_adj, xe, out_adj_k))

    assert out_adj.shape == (N, N) and xe.shape == (N, LATENT)
    assert out_adj_k.shape == (N, N)
    assert not bool(jnp.any(jnp.isnan(out_adj)))
    assert not bool(jnp.any(jnp.isnan(out_adj_k)))
    # hard path keeps at most k entries per row (up to exact ties)
    assert bool(jnp.all((out_adj_k != 0).sum(-1) <= 3))

    # ---- per-kernel checks against pure-JAX references ----
    # K1 (loose tol: x feeds the MXU in bf16)
    xe_p, z_p = node_encoder(x, prep)
    xe_ref = _leaky_relu(x @ params["W1"] + params["b1"])
    z_ref = xe_ref @ params["W2"]
    assert bool(jnp.allclose(xe_p[:, :LATENT], xe_ref, atol=2e-2))
    assert bool(jnp.allclose(z_p[:, :LATENT], z_ref, atol=2e-2))

    # K2 (same inputs -> tight tol)
    diff_z = z_p[:, :LATENT][adj_rows] - z_p[:, :LATENT][adj_cols]
    noise = jax.random.uniform(k_noise1, (adj_rows.shape[0], 1), jnp.float32) * 2.0 - 1.0
    er = edge_rank(diff_z, prep["b2p"], noise)
    er_ref = jax.nn.sigmoid(
        jax.nn.sigmoid(jnp.sum(_leaky_relu(diff_z + prep["b2p"]), -1)) + noise[:, 0])
    assert bool(jnp.allclose(er, er_ref, atol=1e-4))

    # K3 soft gate (same dense/ranks/rowsum -> tight tol)
    dense = jnp.zeros((N, N), jnp.float32).at[adj_rows, adj_cols].add(er)
    rowsum = dense.sum(-1, keepdims=True)
    order = jnp.argsort(-dense, axis=-1)
    ranks = jnp.zeros((N, N), jnp.int32).at[jnp.arange(N)[:, None], order].set(
        jnp.broadcast_to(jnp.arange(N, dtype=jnp.int32)[None, :], (N, N)))
    kk_col = _leaky_relu(rowsum * params["w3"].reshape(()) + params["b3"].reshape(()))
    gate_ref = dense * (1.5 - 0.5 * jnp.tanh(ranks.astype(jnp.float32) - kk_col))
    gate = rank_gate_soft(dense, ranks, rowsum, prep["w3b3"])
    assert bool(jnp.allclose(gate, gate_ref, atol=1e-4))

    # K3 hard mask (exact)
    thr = jax.lax.top_k(dense, 3)[0][:, 2:3]
    hard = topk_mask(dense, thr)
    assert bool(jnp.all(hard == jnp.where(dense >= thr, dense, 0.0)))

    print("KERNEL_OK")
</pallas_src>

<mosaic_0001>
module attributes {stable_mosaic.version = 11 : i64} {
  func.func @_node_encoder_kernel(%arg0: i32, %arg1: memref<8x16xbf16, #tpu.memory_space<vmem>>, %arg2: memref<16x128xbf16, #tpu.memory_space<vmem>>, %arg3: memref<1x128xf32, #tpu.memory_space<vmem>>, %arg4: memref<128x128xf32, #tpu.memory_space<vmem>>, %arg5: memref<8x128xf32, #tpu.memory_space<vmem>>, %arg6: memref<8x128xf32, #tpu.memory_space<vmem>>) attributes {dimension_semantics = [#tpu.dimension_semantics<parallel>], iteration_bounds = array<i64: 1>, scalar_prefetch = 0 : i64, scratch_operands = 0 : i64, tpu.core_type = #tpu.core_type<tc>, window_params = [{transform_indices = @transform_0, window_bounds = array<i64: 8, 16>}, {pipeline_mode = #tpu.pipeline_mode<synchronous>, transform_indices = @transform_1, window_bounds = array<i64: 16, 128>}, {pipeline_mode = #tpu.pipeline_mode<synchronous>, transform_indices = @transform_2, window_bounds = array<i64: 1, 128>}, {pipeline_mode = #tpu.pipeline_mode<synchronous>, transform_indices = @transform_3, window_bounds = array<i64: 128, 128>}, {transform_indices = @transform_4, window_bounds = array<i64: 8, 128>}, {transform_indices = @transform_5, window_bounds = array<i64: 8, 128>}]} {
    %c0 = arith.constant 0 : index
    %c0_0 = arith.constant 0 : index
    %0 = vector.load %arg1[%c0, %c0_0] : memref<8x16xbf16, #tpu.memory_space<vmem>>, vector<8x16xbf16>
    %c0_1 = arith.constant 0 : index
    %c0_2 = arith.constant 0 : index
    %1 = vector.load %arg2[%c0_1, %c0_2] : memref<16x128xbf16, #tpu.memory_space<vmem>>, vector<16x128xbf16>
    %cst = arith.constant dense<0.000000e+00> : vector<8x128xf32>
    %2 = tpu.matmul %0, %1, %cst {dimension_numbers = #tpu.dot_dimension_numbers<[1], [0], [0], [1], [0, 0, 1, 1], [], []>} : vector<8x16xbf16>, vector<16x128xbf16>, vector<8x128xf32> -> vector<8x128xf32>
    %c0_3 = arith.constant 0 : index
    %c0_4 = arith.constant 0 : index
    %3 = vector.load %arg3[%c0_3, %c0_4] : memref<1x128xf32, #tpu.memory_space<vmem>>, vector<1x128xf32>
    %4 = vector.broadcast %3 : vector<1x128xf32> to vector<8x128xf32>
    %5 = arith.addf %2, %4 : vector<8x128xf32>
    %cst_5 = arith.constant 0.000000e+00 : f32
    %6 = vector.broadcast %cst_5 : f32 to vector<8x128xf32>
    %7 = arith.cmpf oge, %5, %6 : vector<8x128xf32>
    %cst_6 = arith.constant 0.00999999977 : f32
    %8 = vector.broadcast %cst_6 : f32 to vector<8x128xf32>
    %9 = arith.mulf %8, %5 : vector<8x128xf32>
    %10 = arith.select %7, %5, %9 : vector<8x128xi1>, vector<8x128xf32>
    %c0_7 = arith.constant 0 : index
    %c0_8 = arith.constant 0 : index
    %11 = vector.load %arg5[%c0_7, %c0_8] : memref<8x128xf32, #tpu.memory_space<vmem>>, vector<8x128xf32>
    tpu.vector_store %arg5[%c0_7, %c0_8], %10 {strides = array<i32>} : memref<8x128xf32, #tpu.memory_space<vmem>>, vector<8x128xf32>,
    %c0_9 = arith.constant 0 : index
    %c0_10 = arith.constant 0 : index
    %12 = vector.load %arg4[%c0_9, %c0_10] : memref<128x128xf32, #tpu.memory_space<vmem>>, vector<128x128xf32>
    %cst_11 = arith.constant dense<0.000000e+00> : vector<8x128xf32>
    %13 = tpu.matmul %10, %12, %cst_11 {dimension_numbers = #tpu.dot_dimension_numbers<[1], [0], [0], [1], [0, 0, 1, 1], [], []>} : vector<8x128xf32>, vector<128x128xf32>, vector<8x128xf32> -> vector<8x128xf32>
    %c0_12 = arith.constant 0 : index
    %c0_13 = arith.constant 0 : index
    %14 = vector.load %arg6[%c0_12, %c0_13] : memref<8x128xf32, #tpu.memory_space<vmem>>, vector<8x128xf32>
    tpu.vector_store %arg6[%c0_12, %c0_13], %13 {strides = array<i32>} : memref<8x128xf32, #tpu.memory_space<vmem>>, vector<8x128xf32>,
    return
  }
  func.func @transform_0(%arg0: i32) -> (i32, i32) {
    %c0_i32 = arith.constant 0 : i32
    %c0_i32_0 = arith.constant 0 : i32
    return %arg0, %c0_i32 : i32, i32
  }
  func.func @transform_1(%arg0: i32) -> (i32, i32) {
    %c0_i32 = arith.constant 0 : i32
    %c0_i32_0 = arith.constant 0 : i32
    %c0_i32_1 = arith.constant 0 : i32
    return %c0_i32, %c0_i32_0 : i32, i32
  }
  func.func @transform_2(%arg0: i32) -> (i32, i32) {
    %c0_i32 = arith.constant 0 : i32
    %c0_i32_0 = arith.constant 0 : i32
    %c0_i32_1 = arith.constant 0 : i32
    return %c0_i32, %c0_i32_0 : i32, i32
  }
  func.func @transform_3(%arg0: i32) -> (i32, i32) {
    %c0_i32 = arith.constant 0 : i32
    %c0_i32_0 = arith.constant 0 : i32
    %c0_i32_1 = arith.constant 0 : i32
    return %c0_i32, %c0_i32_0 : i32, i32
  }
  func.func @transform_4(%arg0: i32) -> (i32, i32) {
    %c0_i32 = arith.constant 0 : i32
    %c0_i32_0 = arith.constant 0 : i32
    return %arg0, %c0_i32 : i32, i32
  }
  func.func @transform_5(%arg0: i32) -> (i32, i32) {
    %c0_i32 = arith.constant 0 : i32
    %c0_i32_0 = arith.constant 0 : i32
    return %arg0, %c0_i32 : i32, i32
  }
}

</mosaic_0001>

<llo_original>
// kernel: tpu_custom_call.1
$region0: #{tpu_custom_call.1}
  #allocation0 [shape = 'u32[]', space=smem, size = 0x4, offset = 0x4, fixed_abs, tag = 'smem constant byte address 0x4 - core index']
  #allocation1 [shape = 'u32[72,128]{1,0:T(1,128)}', space=vmem, size = 0x9000, scoped, tag = 'internal scratch']
  %s0 = inlined_call_operand.hbm [shape: bf16[8,16], index: 0, kind: input, shape index: {}]
  %s1 = inlined_call_operand.hbm [shape: bf16[16,128], index: 1, kind: input, shape index: {}]
  %s2 = inlined_call_operand.vmem [shape: f32[1,128], index: 2, kind: input, shape index: {}]
  %s3 = inlined_call_operand.hbm [shape: f32[128,128], index: 3, kind: input, shape index: {}]
  %s4 = inlined_call_operand.hbm [shape: f32[8,128], index: 4, kind: output, shape index: {0}]
  %s5 = inlined_call_operand.hbm [shape: f32[8,128], index: 5, kind: output, shape index: {1}]
  %6 = xla_tuple %s4, %s5
  %s7 = sld [smem:[#allocation0]]
  $region46: #{tpu_custom_call.1} parent=0
    _
  %s9 = ssub.s32 1, %s7
  %s10 = scalar_select 0, %s9, %s7
  $region1: #{tpu_custom_call.1} parent=0
    #allocation2 [shape = 'u8[2048]{0}', space=vmem, size = 0x800, scoped, tag = 'input window, operand 0, single buffered']
    #allocation3 [shape = 's32[1]{0}', space=sflag, size = 0x4, scoped, tag = 'scoped memory for tpu_custom_call.1']
    #allocation4 [shape = 's32[1]{0}', space=sflag, size = 0x4, scoped, tag = 'scoped memory for tpu_custom_call.1']
    #allocation5 [shape = 'u8[4096]{0}', space=vmem, size = 0x1000, scoped, tag = 'input window, operand 1, single buffered']
    #allocation6 [shape = 's32[1]{0}', space=sflag, size = 0x4, scoped, tag = 'scoped memory for tpu_custom_call.1']
    #allocation7 [shape = 'u8[65536]{0}', space=vmem, size = 0x10000, scoped, tag = 'input window, operand 3, single buffered']
    #allocation8 [shape = 'u8[4096]{0}', space=vmem, size = 0x1000, scoped, tag = 'output window, operand 0, single buffered']
    #allocation9 [shape = 'u8[4096]{0}', space=vmem, size = 0x1000, scoped, tag = 'output window, operand 1, single buffered']
    #allocation10 [shape = 's32[1]{0}', space=sflag, size = 0x4, scoped, tag = 'scoped memory for tpu_custom_call.1']
    %11 = vsyncpa [#allocation3], 0
    %12 = vsyncpa [#allocation6], 0
    %13 = vsyncpa [#allocation4], 0
    %14 = vsyncpa [#allocation10], 0
    // Predicated region
    $region2: #{tpu_custom_call.1} parent=1 // pred_check
      _
    $region3: #{tpu_custom_call.1} parent=1 // pred_check_branch
      %16 = sbr.rel (0) target = $region5
    $region4: #{tpu_custom_call.1} parent=1 // pred_region
      %18 = vsyncadd [#allocation3], 0
      %s20 = sshll.u32 %s0, 4
      %s21 = int_to_ptr.hbm [resolvable:$true] %s20
      %s22 = sshll.u32 [#allocation2], 4
      %s23 = int_to_ptr.vmem [resolvable:$true] %s22
      %25 = dma.hbm_to_vmem [thread:$0]  %s21, 64, %s23, [#allocation3]
    $region5: #{tpu_custom_call.1} parent=1 // pred_fallthru
      _
    // Predicated region
    $region6: #{tpu_custom_call.1} parent=1 // pred_check
      _
    $region7: #{tpu_custom_call.1} parent=1 // pred_check_branch
      %27 = sbr.rel (0) target = $region9
    $region8: #{tpu_custom_call.1} parent=1 // pred_region
      %29 = vsyncadd [#allocation6], 0
      %s30 = sshll.u32 %s1, 4
      %s31 = int_to_ptr.hbm [resolvable:$true] %s30
      %s32 = sshll.u32 [#allocation5], 4
      %s33 = int_to_ptr.vmem [resolvable:$true] %s32
      %38 = dma.hbm_to_vmem [thread:$0]  %s31, 128, %s33, [#allocation6], 64, 64, 4
    $region9: #{tpu_custom_call.1} parent=1 // pred_fallthru
      _
    // Predicated region
    $region10: #{tpu_custom_call.1} parent=1 // pred_check
      _
    $region11: #{tpu_custom_call.1} parent=1 // pred_check_branch
      %40 = sbr.rel (0) target = $region13
    $region12: #{tpu_custom_call.1} parent=1 // pred_region
      _
    $region13: #{tpu_custom_call.1} parent=1 // pred_fallthru
      _
    // Predicated region
    $region14: #{tpu_custom_call.1} parent=1 // pred_check
      _
    $region15: #{tpu_custom_call.1} parent=1 // pred_check_branch
      %42 = sbr.rel (0) target = $region17
    $region16: #{tpu_custom_call.1} parent=1 // pred_region
      %44 = vsyncadd [#allocation6], 0
      %s45 = sshll.u32 %s3, 4
      %s46 = int_to_ptr.hbm [resolvable:$true] %s45
      %s47 = sshll.u32 [#allocation7], 4
      %s48 = int_to_ptr.vmem [resolvable:$true] %s47
      %53 = dma.hbm_to_vmem [thread:$0]  %s46, 2048, %s48, [#allocation6], 128, 128, 8
    $region17: #{tpu_custom_call.1} parent=1 // pred_fallthru
      _
    // Predicated region
    $region18: #{tpu_custom_call.1} parent=1 // pred_check
      _
    $region19: #{tpu_custom_call.1} parent=1 // pred_check_branch
      %55 = sbr.rel (0) target = $region21
    $region20: #{tpu_custom_call.1} parent=1 // pred_region
      %57 = dma.done [#allocation3], 64
    $region21: #{tpu_custom_call.1} parent=1 // pred_fallthru
      _
    // Predicated region
    $region22: #{tpu_custom_call.1} parent=1 // pred_check
      _
    $region23: #{tpu_custom_call.1} parent=1 // pred_check_branch
      %59 = sbr.rel (0) target = $region25
    $region24: #{tpu_custom_call.1} parent=1 // pred_region
      %61 = dma.done [#allocation6], 128
    $region25: #{tpu_custom_call.1} parent=1 // pred_fallthru
      _
    // Predicated region
    $region26: #{tpu_custom_call.1} parent=1 // pred_check
      _
    $region27: #{tpu_custom_call.1} parent=1 // pred_check_branch
      %63 = sbr.rel (0) target = $region29
    $region28: #{tpu_custom_call.1} parent=1 // pred_region
      %65 = dma.done [#allocation6], 2048
    $region29: #{tpu_custom_call.1} parent=1 // pred_fallthru
      _
    %v67 = vld [vmem:[#allocation2] sm:$0xf]
    %v68 = vld [vmem:[#allocation5] sm:$0xf]
    %v69 = vld [vmem:[#allocation5 + $0x4] sm:$0xf]
    %v70 = vld [vmem:[%s2] sm:$0x1]
    %v72 = vperm.slane %v70, 0
    %v76 = vunpack.c.l.b16 %v68
    %v77 = vunpack.c.l.b16 %v69
    %v78 = vpack.c.b16 %v77, %v76
    %vm80 = vcmask 130048
    %v82 = vsel %vm80, %v67, 0
    %84 = vmatpush.bf16.msra.mxu0 0
    %85 = vmatpush.bf16.msra.mxu0 0
    %86 = vmatpush.bf16.msra.mxu0 0
    %87 = vmatpush.bf16.msra.mxu0 0
    %88 = vmatpush.bf16.msra.mxu0 0
    %89 = vmatpush.bf16.msra.mxu0 0
    %90 = vmatpush.bf16.msra.mxu0 0
    %91 = vmatpush.bf16.msra.mxu0 %v78
    %92 = vmatmul.bf16.gmra.mxu0 %v82
    %v93 = vpop.f32.mrf.mxu0
    %v94 = vadd.f32 %v72, %v93
    %v95 = vpop.f32.mrf.mxu0
    %96 = vdwg.mxu0
    %vm97 = vcmp.ge.f32.partialorder %v94, 0.0
    %v98 = vmul.f32 %v94, 0.01
    %v99 = vsel %vm97, %v94, %v98
    %100 = vst [vmem:[#allocation8] sm:$0xff] %v99
    %v101 = vld [vmem:[#allocation7] sm:$0xff]
    %v102 = vld [vmem:[#allocation7 + $0x8] sm:$0xff]
    %v103 = vld [vmem:[#allocation7 + $0x10] sm:$0xff]
    %v104 = vld [vmem:[#allocation7 + $0x18] sm:$0xff]
    %v105 = vld [vmem:[#allocation7 + $0x20] sm:$0xff]
    %v106 = vld [vmem:[#allocation7 + $0x28] sm:$0xff]
    %v107 = vld [vmem:[#allocation7 + $0x30] sm:$0xff]
    %v108 = vld [vmem:[#allocation7 + $0x38] sm:$0xff]
    %v109 = vld [vmem:[#allocation7 + $0x40] sm:$0xff]
    %v110 = vld [vmem:[#allocation7 + $0x48] sm:$0xff]
    %v111 = vld [vmem:[#allocation7 + $0x50] sm:$0xff]
    %v112 = vld [vmem:[#allocation7 + $0x58] sm:$0xff]
    %v113 = vld [vmem:[#allocation7 + $0x60] sm:$0xff]
    %v114 = vld [vmem:[#allocation7 + $0x68] sm:$0xff]
    %v115 = vld [vmem:[#allocation7 + $0x70] sm:$0xff]
    %v116 = vld [vmem:[#allocation7 + $0x78] sm:$0xff]
    %117 = vmatpush.msra.mxu0 %v116
    %118 = vmatpush.msra.mxu0 %v115
    %119 = vmatpush.msra.mxu0 %v114
    %120 = vmatpush.msra.mxu0 %v113
    %121 = vmatpush.msra.mxu0 %v112
    %122 = vmatpush.msra.mxu0 %v111
    %123 = vmatpush.msra.mxu0 %v110
    %124 = vmatpush.msra.mxu0 %v109
    %125 = vmatpush.msra.mxu0 %v108
    %126 = vmatpush.msra.mxu0 %v107
    %127 = vmatpush.msra.mxu0 %v106
    %128 = vmatpush.msra.mxu0 %v105
    %129 = vmatpush.msra.mxu0 %v104
    %130 = vmatpush.msra.mxu0 %v103
    %131 = vmatpush.msra.mxu0 %v102
    %132 = vmatpush.msra.mxu0 %v101
    %133 = vmatmul.f32.gmra.mxu0 %v99
    %v134 = vpop.f32.mrf.mxu0
    %v135 = vadd.f32 0.0, %v134
    %136 = vdwg.mxu0
    %137 = vst [vmem:[#allocation9] sm:$0xff] %v135
    // Predicated region
    $region30: #{tpu_custom_call.1} parent=1 // pred_check
      _
    $region31: #{tpu_custom_call.1} parent=1 // pred_check_branch
      %139 = sbr.rel (0) target = $region33
    $region32: #{tpu_custom_call.1} parent=1 // pred_region
      %141 = vsyncadd [#allocation4], 0
      %s143 = sshll.u32 [#allocation8], 4
      %s144 = int_to_ptr.vmem [resolvable:$true] %s143
      %s145 = sshll.u32 %s4, 4
      %s146 = int_to_ptr.hbm [resolvable:$true] %s145
      %148 = dma.vmem_to_hbm [thread:$0]  %s144, 128, %s146, [#allocation4]
    $region33: #{tpu_custom_call.1} parent=1 // pred_fallthru
      _
    // Predicated region
    $region34: #{tpu_custom_call.1} parent=1 // pred_check
      _
    $region35: #{tpu_custom_call.1} parent=1 // pred_check_branch
      %150 = sbr.rel (0) target = $region37
    $region36: #{tpu_custom_call.1} parent=1 // pred_region
      %152 = vsyncadd [#allocation10], 0
      %s154 = sshll.u32 [#allocation9], 4
      %s155 = int_to_ptr.vmem [resolvable:$true] %s154
      %s156 = sshll.u32 %s5, 4
      %s157 = int_to_ptr.hbm [resolvable:$true] %s156
      %159 = dma.vmem_to_hbm [thread:$0]  %s155, 128, %s157, [#allocation10]
    $region37: #{tpu_custom_call.1} parent=1 // pred_fallthru
      _
    // Predicated region
    $region38: #{tpu_custom_call.1} parent=1 // pred_check
      _
    $region39: #{tpu_custom_call.1} parent=1 // pred_check_branch
      %161 = sbr.rel (0) target = $region41
    $region40: #{tpu_custom_call.1} parent=1 // pred_region
      %163 = dma.done [#allocation4], 128
    $region41: #{tpu_custom_call.1} parent=1 // pred_fallthru
      _
    // Predicated region
    $region42: #{tpu_custom_call.1} parent=1 // pred_check
      _
    $region43: #{tpu_custom_call.1} parent=1 // pred_check_branch
      %165 = sbr.rel (0) target = $region45
    $region44: #{tpu_custom_call.1} parent=1 // pred_region
      %167 = dma.done [#allocation10], 128
    $region45: #{tpu_custom_call.1} parent=1 // pred_fallthru
      _
    %168 = vsyncpa [#allocation3], 1
    %169 = vsyncpa [#allocation6], 1
    %170 = vsyncpa [#allocation4], 1
    %171 = vsyncpa [#allocation10], 1

</llo_original>
